<compile_context>
chip_gen: v5e
topology: v5e:2x2
jax: 0.10.0
libtpu: 0.0.40
codegen_flags: <defaults>
</compile_context>

<pallas_src>
import math
import functools

import jax
import jax.numpy as jnp
import numpy as np
from jax.experimental import pallas as pl
from jax.experimental.pallas import tpu as pltpu


# -----------------------------------------------------------------------------
# Parameter initialization (compute_starting_values, torch -> JAX)
# -----------------------------------------------------------------------------
def compute_starting_values(degree, lo, hi, number_variables):
    lin = jnp.linspace(lo, hi, degree + 1).astype(jnp.float32)
    par = lin.at[1:].set(jnp.log(lin[1:] - lin[:-1]))
    # torch: par.repeat((number_variables, 1)).T -> (degree+1, number_variables)
    return jnp.tile(par[:, None], (1, number_variables))


def _round_up(a, b):
    return ((a + b - 1) // b) * b


@functools.lru_cache(maxsize=None)
def _bernstein_to_shifted_power_matrix(degree):
    """M[m, k] = coeff of w^m in C(deg,k) (0.5+w)^k (0.5-w)^(deg-k), exact f64.

    Expanding about the range midpoint (w = u - 0.5) keeps the Bernstein ->
    power conversion well conditioned in single precision for moderate degrees
    (|w| <= 0.5 strongly damps the large high-order entries)."""
    K = degree + 1
    M = np.zeros((K, K), dtype=np.float64)
    for k in range(K):
        pa = np.array([math.comb(k, i) * 0.5 ** (k - i) for i in range(k + 1)],
                      dtype=np.float64)
        pb = np.array([math.comb(degree - k, j) * 0.5 ** (degree - k - j) * (-1.0) ** j
                       for j in range(degree - k + 1)], dtype=np.float64)
        M[:, k] = math.comb(degree, k) * np.convolve(pa, pb)
    return M


# -----------------------------------------------------------------------------
# Pallas kernel: polynomial value (and optionally derivative) via Horner.
#  power_basis=True : plain Horner in t = x - mid_ext (2 VALU ops / index / sum)
#  power_basis=False: fused bivariate Bernstein reverse-Horner (fallback)
# -----------------------------------------------------------------------------
def _transform_kernel(*refs, degree, with_log_d, power_basis):
    if with_log_d:
        x_ref, norm_ref, cval_ref, cder_ref, out_ref, logd_ref = refs
    else:
        x_ref, norm_ref, cval_ref, out_ref = refs
        cder_ref = logd_ref = None

    x = x_ref[...].astype(jnp.float32)                 # (TM, C) lane-dense tile
    n = degree
    cval = [cval_ref[k, :] for k in range(n + 1)]      # (C,) rows, period-D pattern
    if with_log_d:
        cder = [cder_ref[j, :] for j in range(n)]

    if power_basis:
        # S(t) = sum_m cval[m] t^m ; T(t) = sum_m cder[m] t^m ; t = x - mid_ext
        # (normalization 1/span_ext is pre-folded into the coefficients).
        t = x - norm_ref[0, :]
        S = cval[n]
        for k in range(n - 1, -1, -1):                 # static unroll, 2 ops/idx
            S = S * t + cval[k]
        if with_log_d:
            T = cder[n - 1]
            for k in range(n - 2, -1, -1):
                T = T * t + cder[k]
    else:
        # Bernstein fallback (better conditioned for degree > ~15).
        u = (x - norm_ref[0, :]) * norm_ref[1, :]      # normalized coordinate
        v = 1.0 - u
        S = cval[n]
        if with_log_d:
            T = cder[n - 1]
        vp = None                                      # running power of v
        for k in range(n - 1, -1, -1):                 # static unroll
            if with_log_d and k <= n - 2:
                T = T * u + cder[k] * vp               # vp == v^(n-1-k) here
            vp = v if vp is None else vp * v           # vp == v^(n-k)
            S = S * u + cval[k] * vp

    out_ref[...] = jnp.broadcast_to(S, x.shape).astype(out_ref.dtype)
    if with_log_d:
        # TODO(synk): chain-rule factor 1/(hi_ext-lo_ext) intentionally not
        # applied, mirroring the reference repo's normalized-coordinate
        # derivative behavior.
        logd_ref[...] = jnp.broadcast_to(jnp.log(T), x.shape).astype(logd_ref.dtype)


# -----------------------------------------------------------------------------
# Wrapper == Transformation.forward (inverse=False, covariate=False)
# -----------------------------------------------------------------------------
def transformation_forward(x, params, polynomial_range, degree,
                           span_factor=0.1, monotonically_increasing=True,
                           return_log_d=False, power_basis=None,
                           block_rows=512, target_cols=512):
    N, D = x.shape
    K = degree + 1
    dtype = x.dtype
    f32 = jnp.float32
    if return_log_d:
        assert degree >= 1, "derivative (log_d) requires degree >= 1"
    if power_basis is None:
        power_basis = degree <= 15     # conversion is f32-safe up to ~15

    # --- restrict_parameters (tiny glue): cumsum of [p0, exp(p1..pdeg)] ---
    params = params.astype(f32)
    if monotonically_increasing:
        p_restr = jnp.cumsum(
            jnp.concatenate([params[:1], jnp.exp(params[1:])], axis=0), axis=0)
    else:
        p_restr = params

    # --- span-factor extended normalization range ---
    lo = polynomial_range[0].astype(f32)                       # (D,)
    hi = polynomial_range[1].astype(f32)
    span = hi - lo
    lo_ext = lo - span * span_factor
    span_ext = span * (1.0 + 2.0 * span_factor)
    inv_span = 1.0 / span_ext
    mid_ext = lo_ext + 0.5 * span_ext

    # --- per-variable polynomial coefficients ---
    if power_basis:
        Mmat = _bernstein_to_shifted_power_matrix(degree)      # exact f64 constants
        M32 = jnp.asarray(Mmat, dtype=f32)                     # (K, K)
        # Elementwise contraction (tiny) avoids low-precision MXU passes.
        a_u = jnp.sum(M32[:, :, None] * p_restr[None, :, :], axis=1)   # (K, D)
        inv_pows = inv_span[None, :] ** jnp.arange(K, dtype=f32)[:, None]  # inv^m
        cval = a_u * inv_pows                                  # S = sum cval[m] (x-mid)^m
        if degree >= 1:
            cder = (jnp.arange(1, K, dtype=f32)[:, None] * a_u[1:]) * inv_pows[:degree]
        else:
            cder = jnp.zeros((1, D), f32)                      # unused
        offset = mid_ext
    else:
        comb_val = np.array([math.comb(degree, k) for k in range(K)],
                            dtype=np.float32)[:, None]
        cval = p_restr * comb_val                              # (K, D)
        if degree >= 1:
            comb_der = np.array([degree * math.comb(degree - 1, j) for j in range(degree)],
                                dtype=np.float32)[:, None]
            cder = (p_restr[1:] - p_restr[:-1]) * comb_der     # (degree, D)
        else:
            cder = jnp.zeros((1, D), f32)                      # unused
        offset = lo_ext
    norm = jnp.stack([offset, inv_span], axis=0)               # (2, D)

    # --- lane-dense flat-interleaved layout ---------------------------------
    # x (N, D) is viewed flat as (R, C) with D | C, so flat column c belongs to
    # variable c % D; constants are tiled with the same period.
    L = N * D
    base = (128 * D) // math.gcd(128, D)                       # lcm(128, D)
    if base <= 8192:
        if L % base == 0:
            q = L // base
            m_target = max(1, target_cols // base)
            m = 1
            for cand in range(min(m_target, q), 0, -1):        # prefer C | L (no pad)
                if q % cand == 0:
                    m = cand
                    break
            C = m * base
        else:
            C = base * max(1, target_cols // base)
    else:
        # Very awkward large D: direct (N, D) layout (block last dim == full dim);
        # masked partial-lane stores, but bounded VMEM instead of a huge lcm.
        C = D
    reps = C // D

    rows_needed = -(-L // C)
    n_tile_arrays = 3 if return_log_d else 2
    row_bytes = C * 4
    const_rows = 2 + K + (degree if return_log_d else 0)
    const_bytes = const_rows * row_bytes

    if rows_needed <= 8:
        br = rows_needed
        n_blocks = 1
    else:
        budget = 24 * 1024 * 1024                              # safe on v5e/v6e/v7x
        br_budget = max(8, ((budget - 2 * const_bytes) //
                            max(1, n_tile_arrays * 2 * row_bytes)) // 8 * 8)
        br = min(_round_up(block_rows, 8), br_budget)
        br = min(br, _round_up(-(-rows_needed // 2), 8))       # >= 2 blocks (megacore)
        br = max(br, 8)
        cand = br                                              # prefer br | rows_needed
        while cand >= max(8, br // 2):
            if rows_needed % cand == 0:
                br = cand
                break
            cand -= 8
        n_blocks = -(-rows_needed // br)
    R = n_blocks * br
    L_pad = R * C

    x_flat = x.reshape(-1)
    if L_pad != L:
        # Pad with in-range (per-variable midpoint) values so the discarded tail
        # never produces log(<=0) -> NaN under NaN checkers.
        pad_cols = np.arange(L, L_pad, dtype=np.int64) % D
        pad_vals = mid_ext[pad_cols].astype(dtype)
        x_flat = jnp.concatenate([x_flat, pad_vals], axis=0)
    x2 = x_flat.reshape(R, C)

    norm_t = jnp.tile(norm, (1, reps))                         # (2, C)
    cval_t = jnp.tile(cval, (1, reps))                         # (K, C)
    cder_t = jnp.tile(cder, (1, reps))                         # (degree, C) (if used)

    kernel = functools.partial(_transform_kernel, degree=degree,
                               with_log_d=return_log_d, power_basis=power_basis)

    tile_spec = pl.BlockSpec((br, C), lambda i: (i, 0))
    in_specs = [tile_spec,
                pl.BlockSpec((2, C), lambda i: (0, 0)),        # offset / inv_span rows
                pl.BlockSpec((K, C), lambda i: (0, 0))]        # value coefficients
    inputs = [x2, norm_t, cval_t]
    if return_log_d:
        in_specs.append(pl.BlockSpec((cder.shape[0], C), lambda i: (0, 0)))
        inputs.append(cder_t)
        out_shape = (jax.ShapeDtypeStruct((R, C), dtype),
                     jax.ShapeDtypeStruct((R, C), dtype))
        out_specs = [tile_spec, tile_spec]
    else:
        out_shape = jax.ShapeDtypeStruct((R, C), dtype)
        out_specs = tile_spec

    # vmem limit derived from the actual double-buffered footprint (+ margin)
    footprint = n_tile_arrays * 2 * br * row_bytes + 2 * const_bytes
    vmem_limit = int(min(max(footprint * 5 // 4 + (2 << 20), 8 << 20), 56 << 20))

    result = pl.pallas_call(
        kernel,
        out_shape=out_shape,
        grid_spec=pltpu.PrefetchScalarGridSpec(
            num_scalar_prefetch=0,
            grid=(n_blocks,),
            in_specs=in_specs,
            out_specs=out_specs),
        compiler_params=pltpu.CompilerParams(
            dimension_semantics=("parallel",),                 # megacore sharding on v7x
            vmem_limit_bytes=vmem_limit),
    )(*inputs)

    def unflatten(a):
        if L_pad == L:                                         # free reshape, no slice copy
            return a.reshape(N, D)
        return a.reshape(-1)[:L].reshape(N, D)

    if return_log_d:
        out2, logd2 = result
        return unflatten(out2), unflatten(logd2)
    return unflatten(result)

    # TODO(synk): inverse=True / approximate_inverse (bspline inverse fit) and
    # compute_initial_parameters_transformation (ECDF + host lstsq + plotting)
    # are not kernelized.


# -----------------------------------------------------------------------------
# Pure-JAX reference for correctness check
# -----------------------------------------------------------------------------
def _reference_forward(x, params, polynomial_range, degree, span_factor=0.1):
    pr = jnp.cumsum(jnp.concatenate([params[:1], jnp.exp(params[1:])], 0), 0)
    lo, hi = polynomial_range[0], polynomial_range[1]
    span = hi - lo
    lo_e, hi_e = lo - span * span_factor, hi + span * span_factor
    u = (x - lo_e) / (hi_e - lo_e)
    basis = jnp.stack(
        [math.comb(degree, k) * u ** k * (1.0 - u) ** (degree - k)
         for k in range(degree + 1)], axis=1)                  # (N, K, D)
    out = jnp.sum(basis * pr[None, :, :], axis=1)
    dbasis = []
    for k in range(degree + 1):
        t = jnp.zeros_like(u)
        if k >= 1:
            t = t + math.comb(degree - 1, k - 1) * u ** (k - 1) * (1 - u) ** (degree - k)
        if k <= degree - 1:
            t = t - math.comb(degree - 1, k) * u ** k * (1 - u) ** (degree - 1 - k)
        dbasis.append(degree * t)
    dbasis = jnp.stack(dbasis, axis=1)
    log_d = jnp.log(jnp.sum(dbasis * pr[None, :, :], axis=1))
    return out, log_d


if __name__ == "__main__":
    key = jax.random.PRNGKey(0)
    k1, k2 = jax.random.split(key)

    degree = 9
    number_variables = 4
    N = 2048

    polynomial_range = jnp.array([[-5.0] * number_variables,
                                  [5.0] * number_variables], dtype=jnp.float32)
    params = compute_starting_values(degree, -5.0, 5.0, number_variables)

    x = jax.random.uniform(k1, (N, number_variables),
                           minval=-4.0, maxval=4.0, dtype=jnp.float32)

    # full forward (out + log_d): power-basis Horner path, 2-block grid, no padding
    out, log_d = transformation_forward(x, params, polynomial_range, degree,
                                        return_log_d=True)
    jax.block_until_ready((out, log_d))

    ref_out, ref_log_d = _reference_forward(x, params, polynomial_range, degree)
    np.testing.assert_allclose(np.asarray(out), np.asarray(ref_out),
                               rtol=1e-5, atol=2e-5)
    np.testing.assert_allclose(np.asarray(log_d), np.asarray(ref_log_d),
                               rtol=1e-5, atol=2e-5)

    # single-output fast path + ragged N (padding) + Bernstein fallback kernel
    x_odd = jax.random.uniform(k2, (1000, number_variables),
                               minval=-4.5, maxval=4.5, dtype=jnp.float32)
    out_only = transformation_forward(x_odd, params, polynomial_range, degree,
                                      return_log_d=False, power_basis=False,
                                      block_rows=8, target_cols=128)
    jax.block_until_ready(out_only)
    ref_out2, _ = _reference_forward(x_odd, params, polynomial_range, degree)
    np.testing.assert_allclose(np.asarray(out_only), np.asarray(ref_out2),
                               rtol=1e-5, atol=1e-5)

    # power-basis path, ragged N, no log_d (single small block, padded tail)
    out_only2 = transformation_forward(x_odd, params, polynomial_range, degree,
                                       return_log_d=False)
    jax.block_until_ready(out_only2)
    np.testing.assert_allclose(np.asarray(out_only2), np.asarray(ref_out2),
                               rtol=1e-5, atol=2e-5)

    print("KERNEL_OK")
</pallas_src>

<mosaic_0001>
module attributes {stable_mosaic.version = 11 : i64} {
  func.func @_transform_kernel(%arg0: i32, %arg1: memref<8x512xf32, #tpu.memory_space<vmem>>, %arg2: memref<2x512xf32, #tpu.memory_space<vmem>>, %arg3: memref<10x512xf32, #tpu.memory_space<vmem>>, %arg4: memref<9x512xf32, #tpu.memory_space<vmem>>, %arg5: memref<8x512xf32, #tpu.memory_space<vmem>>, %arg6: memref<8x512xf32, #tpu.memory_space<vmem>>) attributes {dimension_semantics = [#tpu.dimension_semantics<parallel>], iteration_bounds = array<i64: 2>, scalar_prefetch = 0 : i64, scratch_operands = 0 : i64, tpu.core_type = #tpu.core_type<tc>, window_params = [{transform_indices = @transform_0, window_bounds = array<i64: 8, 512>}, {pipeline_mode = #tpu.pipeline_mode<synchronous>, transform_indices = @transform_1, window_bounds = array<i64: 2, 512>}, {pipeline_mode = #tpu.pipeline_mode<synchronous>, transform_indices = @transform_2, window_bounds = array<i64: 10, 512>}, {pipeline_mode = #tpu.pipeline_mode<synchronous>, transform_indices = @transform_3, window_bounds = array<i64: 9, 512>}, {transform_indices = @transform_4, window_bounds = array<i64: 8, 512>}, {transform_indices = @transform_5, window_bounds = array<i64: 8, 512>}]} {
    %c0 = arith.constant 0 : index
    %c0_0 = arith.constant 0 : index
    %0 = vector.load %arg1[%c0, %c0_0] : memref<8x512xf32, #tpu.memory_space<vmem>>, vector<8x512xf32>
    %c0_1 = arith.constant 0 : index
    %c0_2 = arith.constant 0 : index
    %1 = vector.load %arg3[%c0_1, %c0_2] : memref<10x512xf32, #tpu.memory_space<vmem>>, vector<1x512xf32>
    %2 = vector.shape_cast %1 : vector<1x512xf32> to vector<512xf32>
    %c1 = arith.constant 1 : index
    %c0_3 = arith.constant 0 : index
    %3 = vector.load %arg3[%c1, %c0_3] : memref<10x512xf32, #tpu.memory_space<vmem>>, vector<1x512xf32>
    %4 = vector.shape_cast %3 : vector<1x512xf32> to vector<512xf32>
    %c2 = arith.constant 2 : index
    %c0_4 = arith.constant 0 : index
    %5 = vector.load %arg3[%c2, %c0_4] : memref<10x512xf32, #tpu.memory_space<vmem>>, vector<1x512xf32>
    %6 = vector.shape_cast %5 : vector<1x512xf32> to vector<512xf32>
    %c3 = arith.constant 3 : index
    %c0_5 = arith.constant 0 : index
    %7 = vector.load %arg3[%c3, %c0_5] : memref<10x512xf32, #tpu.memory_space<vmem>>, vector<1x512xf32>
    %8 = vector.shape_cast %7 : vector<1x512xf32> to vector<512xf32>
    %c4 = arith.constant 4 : index
    %c0_6 = arith.constant 0 : index
    %9 = vector.load %arg3[%c4, %c0_6] : memref<10x512xf32, #tpu.memory_space<vmem>>, vector<1x512xf32>
    %10 = vector.shape_cast %9 : vector<1x512xf32> to vector<512xf32>
    %c5 = arith.constant 5 : index
    %c0_7 = arith.constant 0 : index
    %11 = vector.load %arg3[%c5, %c0_7] : memref<10x512xf32, #tpu.memory_space<vmem>>, vector<1x512xf32>
    %12 = vector.shape_cast %11 : vector<1x512xf32> to vector<512xf32>
    %c6 = arith.constant 6 : index
    %c0_8 = arith.constant 0 : index
    %13 = vector.load %arg3[%c6, %c0_8] : memref<10x512xf32, #tpu.memory_space<vmem>>, vector<1x512xf32>
    %14 = vector.shape_cast %13 : vector<1x512xf32> to vector<512xf32>
    %c7 = arith.constant 7 : index
    %c0_9 = arith.constant 0 : index
    %15 = vector.load %arg3[%c7, %c0_9] : memref<10x512xf32, #tpu.memory_space<vmem>>, vector<1x512xf32>
    %16 = vector.shape_cast %15 : vector<1x512xf32> to vector<512xf32>
    %c8 = arith.constant 8 : index
    %c0_10 = arith.constant 0 : index
    %17 = vector.load %arg3[%c8, %c0_10] : memref<10x512xf32, #tpu.memory_space<vmem>>, vector<1x512xf32>
    %18 = vector.shape_cast %17 : vector<1x512xf32> to vector<512xf32>
    %c9 = arith.constant 9 : index
    %c0_11 = arith.constant 0 : index
    %19 = vector.load %arg3[%c9, %c0_11] : memref<10x512xf32, #tpu.memory_space<vmem>>, vector<1x512xf32>
    %20 = vector.shape_cast %19 : vector<1x512xf32> to vector<512xf32>
    %c0_12 = arith.constant 0 : index
    %c0_13 = arith.constant 0 : index
    %21 = vector.load %arg4[%c0_12, %c0_13] : memref<9x512xf32, #tpu.memory_space<vmem>>, vector<1x512xf32>
    %22 = vector.shape_cast %21 : vector<1x512xf32> to vector<512xf32>
    %c1_14 = arith.constant 1 : index
    %c0_15 = arith.constant 0 : index
    %23 = vector.load %arg4[%c1_14, %c0_15] : memref<9x512xf32, #tpu.memory_space<vmem>>, vector<1x512xf32>
    %24 = vector.shape_cast %23 : vector<1x512xf32> to vector<512xf32>
    %c2_16 = arith.constant 2 : index
    %c0_17 = arith.constant 0 : index
    %25 = vector.load %arg4[%c2_16, %c0_17] : memref<9x512xf32, #tpu.memory_space<vmem>>, vector<1x512xf32>
    %26 = vector.shape_cast %25 : vector<1x512xf32> to vector<512xf32>
    %c3_18 = arith.constant 3 : index
    %c0_19 = arith.constant 0 : index
    %27 = vector.load %arg4[%c3_18, %c0_19] : memref<9x512xf32, #tpu.memory_space<vmem>>, vector<1x512xf32>
    %28 = vector.shape_cast %27 : vector<1x512xf32> to vector<512xf32>
    %c4_20 = arith.constant 4 : index
    %c0_21 = arith.constant 0 : index
    %29 = vector.load %arg4[%c4_20, %c0_21] : memref<9x512xf32, #tpu.memory_space<vmem>>, vector<1x512xf32>
    %30 = vector.shape_cast %29 : vector<1x512xf32> to vector<512xf32>
    %c5_22 = arith.constant 5 : index
    %c0_23 = arith.constant 0 : index
    %31 = vector.load %arg4[%c5_22, %c0_23] : memref<9x512xf32, #tpu.memory_space<vmem>>, vector<1x512xf32>
    %32 = vector.shape_cast %31 : vector<1x512xf32> to vector<512xf32>
    %c6_24 = arith.constant 6 : index
    %c0_25 = arith.constant 0 : index
    %33 = vector.load %arg4[%c6_24, %c0_25] : memref<9x512xf32, #tpu.memory_space<vmem>>, vector<1x512xf32>
    %34 = vector.shape_cast %33 : vector<1x512xf32> to vector<512xf32>
    %c7_26 = arith.constant 7 : index
    %c0_27 = arith.constant 0 : index
    %35 = vector.load %arg4[%c7_26, %c0_27] : memref<9x512xf32, #tpu.memory_space<vmem>>, vector<1x512xf32>
    %36 = vector.shape_cast %35 : vector<1x512xf32> to vector<512xf32>
    %c8_28 = arith.constant 8 : index
    %c0_29 = arith.constant 0 : index
    %37 = vector.load %arg4[%c8_28, %c0_29] : memref<9x512xf32, #tpu.memory_space<vmem>>, vector<1x512xf32>
    %38 = vector.shape_cast %37 : vector<1x512xf32> to vector<512xf32>
    %c0_30 = arith.constant 0 : index
    %c0_31 = arith.constant 0 : index
    %39 = vector.load %arg2[%c0_30, %c0_31] : memref<2x512xf32, #tpu.memory_space<vmem>>, vector<1x512xf32>
    %40 = vector.shape_cast %39 : vector<1x512xf32> to vector<512xf32>
    %41 = vector.shape_cast %40 : vector<512xf32> to vector<1x512xf32>
    %42 = vector.broadcast %41 : vector<1x512xf32> to vector<8x512xf32>
    %43 = arith.subf %0, %42 : vector<8x512xf32>
    %44 = vector.shape_cast %20 : vector<512xf32> to vector<1x512xf32>
    %45 = vector.broadcast %44 : vector<1x512xf32> to vector<8x512xf32>
    %46 = arith.mulf %45, %43 : vector<8x512xf32>
    %47 = vector.shape_cast %18 : vector<512xf32> to vector<1x512xf32>
    %48 = vector.broadcast %47 : vector<1x512xf32> to vector<8x512xf32>
    %49 = arith.addf %46, %48 : vector<8x512xf32>
    %50 = arith.mulf %49, %43 : vector<8x512xf32>
    %51 = vector.shape_cast %16 : vector<512xf32> to vector<1x512xf32>
    %52 = vector.broadcast %51 : vector<1x512xf32> to vector<8x512xf32>
    %53 = arith.addf %50, %52 : vector<8x512xf32>
    %54 = arith.mulf %53, %43 : vector<8x512xf32>
    %55 = vector.shape_cast %14 : vector<512xf32> to vector<1x512xf32>
    %56 = vector.broadcast %55 : vector<1x512xf32> to vector<8x512xf32>
    %57 = arith.addf %54, %56 : vector<8x512xf32>
    %58 = arith.mulf %57, %43 : vector<8x512xf32>
    %59 = vector.shape_cast %12 : vector<512xf32> to vector<1x512xf32>
    %60 = vector.broadcast %59 : vector<1x512xf32> to vector<8x512xf32>
    %61 = arith.addf %58, %60 : vector<8x512xf32>
    %62 = arith.mulf %61, %43 : vector<8x512xf32>
    %63 = vector.shape_cast %10 : vector<512xf32> to vector<1x512xf32>
    %64 = vector.broadcast %63 : vector<1x512xf32> to vector<8x512xf32>
    %65 = arith.addf %62, %64 : vector<8x512xf32>
    %66 = arith.mulf %65, %43 : vector<8x512xf32>
    %67 = vector.shape_cast %8 : vector<512xf32> to vector<1x512xf32>
    %68 = vector.broadcast %67 : vector<1x512xf32> to vector<8x512xf32>
    %69 = arith.addf %66, %68 : vector<8x512xf32>
    %70 = arith.mulf %69, %43 : vector<8x512xf32>
    %71 = vector.shape_cast %6 : vector<512xf32> to vector<1x512xf32>
    %72 = vector.broadcast %71 : vector<1x512xf32> to vector<8x512xf32>
    %73 = arith.addf %70, %72 : vector<8x512xf32>
    %74 = arith.mulf %73, %43 : vector<8x512xf32>
    %75 = vector.shape_cast %4 : vector<512xf32> to vector<1x512xf32>
    %76 = vector.broadcast %75 : vector<1x512xf32> to vector<8x512xf32>
    %77 = arith.addf %74, %76 : vector<8x512xf32>
    %78 = arith.mulf %77, %43 : vector<8x512xf32>
    %79 = vector.shape_cast %2 : vector<512xf32> to vector<1x512xf32>
    %80 = vector.broadcast %79 : vector<1x512xf32> to vector<8x512xf32>
    %81 = arith.addf %78, %80 : vector<8x512xf32>
    %82 = vector.shape_cast %38 : vector<512xf32> to vector<1x512xf32>
    %83 = vector.broadcast %82 : vector<1x512xf32> to vector<8x512xf32>
    %84 = arith.mulf %83, %43 : vector<8x512xf32>
    %85 = vector.shape_cast %36 : vector<512xf32> to vector<1x512xf32>
    %86 = vector.broadcast %85 : vector<1x512xf32> to vector<8x512xf32>
    %87 = arith.addf %84, %86 : vector<8x512xf32>
    %88 = arith.mulf %87, %43 : vector<8x512xf32>
    %89 = vector.shape_cast %34 : vector<512xf32> to vector<1x512xf32>
    %90 = vector.broadcast %89 : vector<1x512xf32> to vector<8x512xf32>
    %91 = arith.addf %88, %90 : vector<8x512xf32>
    %92 = arith.mulf %91, %43 : vector<8x512xf32>
    %93 = vector.shape_cast %32 : vector<512xf32> to vector<1x512xf32>
    %94 = vector.broadcast %93 : vector<1x512xf32> to vector<8x512xf32>
    %95 = arith.addf %92, %94 : vector<8x512xf32>
    %96 = arith.mulf %95, %43 : vector<8x512xf32>
    %97 = vector.shape_cast %30 : vector<512xf32> to vector<1x512xf32>
    %98 = vector.broadcast %97 : vector<1x512xf32> to vector<8x512xf32>
    %99 = arith.addf %96, %98 : vector<8x512xf32>
    %100 = arith.mulf %99, %43 : vector<8x512xf32>
    %101 = vector.shape_cast %28 : vector<512xf32> to vector<1x512xf32>
    %102 = vector.broadcast %101 : vector<1x512xf32> to vector<8x512xf32>
    %103 = arith.addf %100, %102 : vector<8x512xf32>
    %104 = arith.mulf %103, %43 : vector<8x512xf32>
    %105 = vector.shape_cast %26 : vector<512xf32> to vector<1x512xf32>
    %106 = vector.broadcast %105 : vector<1x512xf32> to vector<8x512xf32>
    %107 = arith.addf %104, %106 : vector<8x512xf32>
    %108 = arith.mulf %107, %43 : vector<8x512xf32>
    %109 = vector.shape_cast %24 : vector<512xf32> to vector<1x512xf32>
    %110 = vector.broadcast %109 : vector<1x512xf32> to vector<8x512xf32>
    %111 = arith.addf %108, %110 : vector<8x512xf32>
    %112 = arith.mulf %111, %43 : vector<8x512xf32>
    %113 = vector.shape_cast %22 : vector<512xf32> to vector<1x512xf32>
    %114 = vector.broadcast %113 : vector<1x512xf32> to vector<8x512xf32>
    %115 = arith.addf %112, %114 : vector<8x512xf32>
    %c0_32 = arith.constant 0 : index
    %c0_33 = arith.constant 0 : index
    %116 = vector.load %arg5[%c0_32, %c0_33] : memref<8x512xf32, #tpu.memory_space<vmem>>, vector<8x512xf32>
    tpu.vector_store %arg5[%c0_32, %c0_33], %81 {strides = array<i32>} : memref<8x512xf32, #tpu.memory_space<vmem>>, vector<8x512xf32>,
    %117 = math.log %115 : vector<8x512xf32>
    %c0_34 = arith.constant 0 : index
    %c0_35 = arith.constant 0 : index
    %118 = vector.load %arg6[%c0_34, %c0_35] : memref<8x512xf32, #tpu.memory_space<vmem>>, vector<8x512xf32>
    tpu.vector_store %arg6[%c0_34, %c0_35], %117 {strides = array<i32>} : memref<8x512xf32, #tpu.memory_space<vmem>>, vector<8x512xf32>,
    return
  }
  func.func @transform_0(%arg0: i32) -> (i32, i32) {
    %c0_i32 = arith.constant 0 : i32
    %c0_i32_0 = arith.constant 0 : i32
    return %arg0, %c0_i32 : i32, i32
  }
  func.func @transform_1(%arg0: i32) -> (i32, i32) {
    %c0_i32 = arith.constant 0 : i32
    %c0_i32_0 = arith.constant 0 : i32
    %c0_i32_1 = arith.constant 0 : i32
    return %c0_i32, %c0_i32_0 : i32, i32
  }
  func.func @transform_2(%arg0: i32) -> (i32, i32) {
    %c0_i32 = arith.constant 0 : i32
    %c0_i32_0 = arith.constant 0 : i32
    %c0_i32_1 = arith.constant 0 : i32
    return %c0_i32, %c0_i32_0 : i32, i32
  }
  func.func @transform_3(%arg0: i32) -> (i32, i32) {
    %c0_i32 = arith.constant 0 : i32
    %c0_i32_0 = arith.constant 0 : i32
    %c0_i32_1 = arith.constant 0 : i32
    return %c0_i32, %c0_i32_0 : i32, i32
  }
  func.func @transform_4(%arg0: i32) -> (i32, i32) {
    %c0_i32 = arith.constant 0 : i32
    %c0_i32_0 = arith.constant 0 : i32
    return %arg0, %c0_i32 : i32, i32
  }
  func.func @transform_5(%arg0: i32) -> (i32, i32) {
    %c0_i32 = arith.constant 0 : i32
    %c0_i32_0 = arith.constant 0 : i32
    return %arg0, %c0_i32 : i32, i32
  }
}

</mosaic_0001>

<llo_original>
// kernel: tpu_custom_call.1
$region0: #{tpu_custom_call.1}
  #allocation0 [shape = 'u32[]', space=smem, size = 0x4, offset = 0x4, fixed_abs, tag = 'smem constant byte address 0x4 - core index']
  #allocation1 [shape = 'u32[72,128]{1,0:T(1,128)}', space=vmem, size = 0x9000, scoped, tag = 'internal scratch']
  %s0 = inlined_call_operand.hbm [shape: f32[16,512], index: 0, kind: input, shape index: {}]
  %s1 = inlined_call_operand.hbm [shape: f32[2,512], index: 1, kind: input, shape index: {}]
  %s2 = inlined_call_operand.hbm [shape: f32[10,512], index: 2, kind: input, shape index: {}]
  %s3 = inlined_call_operand.hbm [shape: f32[9,512], index: 3, kind: input, shape index: {}]
  %s4 = inlined_call_operand.hbm [shape: f32[16,512], index: 4, kind: output, shape index: {0}]
  %s5 = inlined_call_operand.hbm [shape: f32[16,512], index: 5, kind: output, shape index: {1}]
  %6 = xla_tuple %s4, %s5
  %s7 = sld [smem:[#allocation0]]
  $region73: #{tpu_custom_call.1} parent=0
    _
  %s9 = ssub.s32 1, %s7
  %s10 = scalar_select 0, %s9, %s7
  $region1: #{tpu_custom_call.1} parent=0
    #allocation2 [shape = 'u8[32768]{0}', space=vmem, size = 0x8000, scoped, tag = 'input window, operand 0']
    #allocation3 [shape = 's32[2]{0}', space=sflag, size = 0x8, scoped, tag = 'scoped memory for tpu_custom_call.1']
    #allocation4 [shape = 's32[2]{0}', space=sflag, size = 0x8, scoped, tag = 'scoped memory for tpu_custom_call.1']
    #allocation5 [shape = 'u8[4096]{0}', space=vmem, size = 0x1000, scoped, tag = 'input window, operand 1, single buffered']
    #allocation6 [shape = 's32[1]{0}', space=sflag, size = 0x4, scoped, tag = 'scoped memory for tpu_custom_call.1']
    #allocation7 [shape = 'u8[32768]{0}', space=vmem, size = 0x8000, scoped, tag = 'input window, operand 2, single buffered']
    #allocation8 [shape = 'u8[32768]{0}', space=vmem, size = 0x8000, scoped, tag = 'input window, operand 3, single buffered']
    #allocation9 [shape = 's32[1]{0}', space=sflag, size = 0x4, scoped, tag = 'scoped memory for tpu_custom_call.1']
    #allocation10 [shape = 'u8[32768]{0}', space=vmem, size = 0x8000, scoped, tag = 'output window, operand 0']
    #allocation11 [shape = 'u8[32768]{0}', space=vmem, size = 0x8000, scoped, tag = 'output window, operand 1']
    #allocation12 [shape = 's32[2]{0}', space=sflag, size = 0x8, scoped, tag = 'scoped memory for tpu_custom_call.1']
    %11 = vsyncpa [#allocation3], 0
    %s12 = scalar_lea.sflag [#allocation3], 1
    %13 = vsyncpa %s12, 0
    %14 = vsyncpa [#allocation6], 0
    %15 = vsyncpa [#allocation9], 0
    %16 = vsyncpa [#allocation4], 0
    %s17 = scalar_lea.sflag [#allocation4], 1
    %18 = vsyncpa %s17, 0
    %19 = vsyncpa [#allocation12], 0
    %s20 = scalar_lea.sflag [#allocation12], 1
    %21 = vsyncpa %s20, 0
    loop: start=0, step=1, limit=4
    $region2: #{tpu_custom_call.1} parent=1 // loop_pre_header
      _
    $region3: #{tpu_custom_call.1} parent=1 // loop_header
      %s23 = sphi 0, %s27
      %p24 = scmp.ge.s32.totalorder %s23, 4
      %s33 = sphi 0, %s35
      %s36 = sphi 0, %s33
      %s37 = sphi 0, %s36
      %s53 = sphi 0, %s37
      %s57 = sphi 0, %s57
      %s59 = sphi 0, %s57
      %s60 = sphi 0, %s59
      %s74 = sphi 0, %s60
      %s78 = sphi 0, %s78
      %s80 = sphi 0, %s78
      %s81 = sphi 0, %s80
      %s95 = sphi 0, %s81
      %s99 = sphi 0, %s99
      %s101 = sphi 0, %s99
      %s102 = sphi 0, %s101
      %s116 = sphi 0, %s102
      %s122 = sphi 0, %s124
      %s125 = sphi 0, %s122
      %s126 = sphi 0, %s125
      %s142 = sphi 0, %s126
      %s148 = sphi 0, %s150
      %s151 = sphi 0, %s148
      %s152 = sphi 0, %s151
      %s168 = sphi 0, %s152
    $region4: #{tpu_custom_call.1} parent=1 // loop_header_branch
      %26 = sbr.rel (%p24) target = $region8
    $region5: #{tpu_custom_call.1} parent=1 // loop_body
      %s28 = ssub.s32 %s23, 1
      %s29 = ssub.s32 %s23, 2
      %s30 = sadd.s32 %s23, 1
      %s31 = ssub.s32 %s23, %s30
      %p32 = scmp.eq.s32.totalorder %s31, 0
      %s34 = sadd.s32 %s33, 1
      %s35 = scalar_select %p32, %s33, %s34
      %p38 = pneg %p32
      %p39 = scmp.eq.s32.totalorder %s23, 1
      %p40 = por %p38, %p39
      %p41 = scmp.ne.s32.totalorder %s33, %s36
      %p42 = scmp.eq.s32.totalorder %s23, 0
      %p43 = por %p41, %p42
      %p44 = scmp.ne.s32.totalorder %s33, %s36
      %p45 = scmp.eq.s32.totalorder %s28, 1
      %p46 = por %p44, %p45
      %p47 = scmp.ne.s32.totalorder %s36, %s37
      %p48 = scmp.eq.s32.totalorder %s28, 0
      %p49 = por %p47, %p48
      %p50 = scmp.ne.s32.totalorder %s36, %s37
      %p51 = scmp.eq.s32.totalorder %s29, 1
      %p52 = por %p50, %p51
      %p54 = scmp.ne.s32.totalorder %s37, %s53
      %p55 = scmp.eq.s32.totalorder %s29, 0
      %p56 = por %p54, %p55
      %s58 = sadd.s32 %s57, 1
      %p61 = scmp.eq.s32.totalorder %s23, 1
      %p62 = scmp.ne.s32.totalorder %s57, %s59
      %p63 = scmp.eq.s32.totalorder %s23, 0
      %p64 = por %p62, %p63
      %p65 = scmp.ne.s32.totalorder %s57, %s59
      %p66 = scmp.eq.s32.totalorder %s28, 1
      %p67 = por %p65, %p66
      %p68 = scmp.ne.s32.totalorder %s59, %s60
      %p69 = scmp.eq.s32.totalorder %s28, 0
      %p70 = por %p68, %p69
      %p71 = scmp.ne.s32.totalorder %s59, %s60
      %p72 = scmp.eq.s32.totalorder %s29, 1
      %p73 = por %p71, %p72
      %p75 = scmp.ne.s32.totalorder %s60, %s74
      %p76 = scmp.eq.s32.totalorder %s29, 0
      %p77 = por %p75, %p76
      %s79 = sadd.s32 %s78, 1
      %p82 = scmp.eq.s32.totalorder %s23, 1
      %p83 = scmp.ne.s32.totalorder %s78, %s80
      %p84 = scmp.eq.s32.totalorder %s23, 0
      %p85 = por %p83, %p84
      %p86 = scmp.ne.s32.totalorder %s78, %s80
      %p87 = scmp.eq.s32.totalorder %s28, 1
      %p88 = por %p86, %p87
      %p89 = scmp.ne.s32.totalorder %s80, %s81
      %p90 = scmp.eq.s32.totalorder %s28, 0
      %p91 = por %p89, %p90
      %p92 = scmp.ne.s32.totalorder %s80, %s81
      %p93 = scmp.eq.s32.totalorder %s29, 1
      %p94 = por %p92, %p93
      %p96 = scmp.ne.s32.totalorder %s81, %s95
      %p97 = scmp.eq.s32.totalorder %s29, 0
      %p98 = por %p96, %p97
      %s100 = sadd.s32 %s99, 1
      %p103 = scmp.eq.s32.totalorder %s23, 1
      %p104 = scmp.ne.s32.totalorder %s99, %s101
      %p105 = scmp.eq.s32.totalorder %s23, 0
      %p106 = por %p104, %p105
      %p107 = scmp.ne.s32.totalorder %s99, %s101
      %p108 = scmp.eq.s32.totalorder %s28, 1
      %p109 = por %p107, %p108
      %p110 = scmp.ne.s32.totalorder %s101, %s102
      %p111 = scmp.eq.s32.totalorder %s28, 0
      %p112 = por %p110, %p111
      %p113 = scmp.ne.s32.totalorder %s101, %s102
      %p114 = scmp.eq.s32.totalorder %s29, 1
      %p115 = por %p113, %p114
      %p117 = scmp.ne.s32.totalorder %s102, %s116
      %p118 = scmp.eq.s32.totalorder %s29, 0
      %p119 = por %p117, %p118
      %s120 = ssub.s32 %s23, %s30
      %p121 = scmp.eq.s32.totalorder %s120, 0
      %s123 = sadd.s32 %s122, 1
      %s124 = scalar_select %p121, %s122, %s123
      %p127 = pneg %p121
      %p128 = scmp.eq.s32.totalorder %s23, 1
      %p129 = por %p127, %p128
      %p130 = scmp.ne.s32.totalorder %s122, %s125
      %p131 = scmp.eq.s32.totalorder %s23, 0
      %p132 = por %p130, %p131
      %p133 = scmp.ne.s32.totalorder %s122, %s125
      %p134 = scmp.eq.s32.totalorder %s28, 1
      %p135 = por %p133, %p134
      %p136 = scmp.ne.s32.totalorder %s125, %s126
      %p137 = scmp.eq.s32.totalorder %s28, 0
      %p138 = por %p136, %p137
      %p139 = scmp.ne.s32.totalorder %s125, %s126
      %p140 = scmp.eq.s32.totalorder %s29, 1
      %p141 = por %p139, %p140
      %p143 = scmp.ne.s32.totalorder %s126, %s142
      %p144 = scmp.eq.s32.totalorder %s29, 0
      %p145 = por %p143, %p144
      %s146 = ssub.s32 %s23, %s30
      %p147 = scmp.eq.s32.totalorder %s146, 0
      %s149 = sadd.s32 %s148, 1
      %s150 = scalar_select %p147, %s148, %s149
      %p153 = pneg %p147
      %p154 = scmp.eq.s32.totalorder %s23, 1
      %p155 = por %p153, %p154
      %p156 = scmp.ne.s32.totalorder %s148, %s151
      %p157 = scmp.eq.s32.totalorder %s23, 0
      %p158 = por %p156, %p157
      %p159 = scmp.ne.s32.totalorder %s148, %s151
      %p160 = scmp.eq.s32.totalorder %s28, 1
      %p161 = por %p159, %p160
      %p162 = scmp.ne.s32.totalorder %s151, %s152
      %p163 = scmp.eq.s32.totalorder %s28, 0
      %p164 = por %p162, %p163
      %p165 = scmp.ne.s32.totalorder %s151, %s152
      %p166 = scmp.eq.s32.totalorder %s29, 1
      %p167 = por %p165, %p166
      %p169 = scmp.ne.s32.totalorder %s152, %s168
      %p170 = scmp.eq.s32.totalorder %s29, 0
      %p171 = por %p169, %p170
      %p172 = scmp.le.s32.totalorder 1, %s23
      %p173 = scmp.lt.s32.totalorder %s23, 3
      %p174 = pnand %p172, %p173
      %p175 = pneg %p174
      // Predicated region
      $region9: #{tpu_custom_call.1} parent=5 // pred_check
        _
      $region10: #{tpu_custom_call.1} parent=5 // pred_check_branch
        %177 = sbr.rel (%p174) target = $region12
      $region11: #{tpu_custom_call.1} parent=5 // pred_region
        %s178 = ssub.s32 %s23, 1
        // Predicated region
        $region13: #{tpu_custom_call.1} parent=11 // pred_check
          %p179 = pneg %p70
        $region14: #{tpu_custom_call.1} parent=11 // pred_check_branch
          %181 = sbr.rel (%p179) target = $region16
        $region15: #{tpu_custom_call.1} parent=11 // pred_region
          %183 = vsyncadd [#allocation6], 0
          %s185 = sshll.u32 %s1, 4
          %s186 = int_to_ptr.hbm [resolvable:$true] %s185
          %s187 = sshll.u32 [#allocation5], 4
          %s188 = int_to_ptr.vmem [resolvable:$true] %s187
          %190 = dma.hbm_to_vmem [thread:$0]  %s186, 128, %s188, [#allocation6]
        $region16: #{tpu_custom_call.1} parent=11 // pred_fallthru
          _
        // Predicated region
        $region17: #{tpu_custom_call.1} parent=11 // pred_check
          %p191 = pneg %p91
        $region18: #{tpu_custom_call.1} parent=11 // pred_check_branch
          %193 = sbr.rel (%p191) target = $region20
        $region19: #{tpu_custom_call.1} parent=11 // pred_region
          %195 = vsyncadd [#allocation6], 0
          %s196 = sshll.u32 %s2, 4
          %s197 = int_to_ptr.hbm [resolvable:$true] %s196
          %s198 = sshll.u32 [#allocation7], 4
          %s199 = int_to_ptr.vmem [resolvable:$true] %s198
          %204 = dma.hbm_to_vmem [thread:$0]  %s197, 1024, %s199, [#allocation6], 512, 512, 32
        $region20: #{tpu_custom_call.1} parent=11 // pred_fallthru
          _
        // Predicated region
        $region21: #{tpu_custom_call.1} parent=11 // pred_check
          %p205 = pneg %p112
        $region22: #{tpu_custom_call.1} parent=11 // pred_check_branch
          %207 = sbr.rel (%p205) target = $region24
        $region23: #{tpu_custom_call.1} parent=11 // pred_region
          %209 = vsyncadd [#allocation9], 0
          %s210 = sshll.u32 %s3, 4
          %s211 = int_to_ptr.hbm [resolvable:$true] %s210
          %s212 = sshll.u32 [#allocation8], 4
          %s213 = int_to_ptr.vmem [resolvable:$true] %s212
          %218 = dma.hbm_to_vmem [thread:$0]  %s211, 1024, %s213, [#allocation9], 512, 512, 32
        $region24: #{tpu_custom_call.1} parent=11 // pred_fallthru
          _
      $region12: #{tpu_custom_call.1} parent=5 // pred_fallthru
        _
      %p219 = scmp.lt.s32.totalorder %s23, 2
      // Predicated region
      $region25: #{tpu_custom_call.1} parent=5 // pred_check
        %p220 = pneg %p219
      $region26: #{tpu_custom_call.1} parent=5 // pred_check_branch
        %222 = sbr.rel (%p220) target = $region28
      $region27: #{tpu_custom_call.1} parent=5 // pred_region
        // Predicated region
        $region29: #{tpu_custom_call.1} parent=27 // pred_check
          %p223 = pneg %p43
        $region30: #{tpu_custom_call.1} parent=27 // pred_check_branch
          %225 = sbr.rel (%p223) target = $region32
        $region31: #{tpu_custom_call.1} parent=27 // pred_region
          %s226 = sand.u32 %s33, 1
          %s227 = scalar_lea.sflag [#allocation3], %s226
          %s228 = sand.u32 %s33, 1
          %s229 = smul.addr %s228, 32
          %s230 = scalar_lea.vmem [#allocation2], %s229
          %232 = vsyncadd %s227, 0
          %s233 = smul.addr %s23, 4
          %s234 = smul.addr %s233, 8
          %s235 = scalar_lea.hbm %s0, %s234
          %s237 = sshll.u32 %s235, 4
          %s238 = int_to_ptr.hbm [resolvable:$true] %s237
          %s239 = sshll.u32 %s230, 4
          %s240 = int_to_ptr.vmem [resolvable:$true] %s239
          %242 = dma.hbm_to_vmem [thread:$0]  %s238, 512, %s240, %s227
        $region32: #{tpu_custom_call.1} parent=27 // pred_fallthru
          _
      $region28: #{tpu_custom_call.1} parent=5 // pred_fallthru
        _
      %p243 = scmp.le.s32.totalorder 1, %s23
      %p244 = scmp.lt.s32.totalorder %s23, 3
      %p245 = pnand %p243, %p244
      %p246 = pneg %p245
      // Predicated region
      $region33: #{tpu_custom_call.1} parent=5 // pred_check
        _
      $region34: #{tpu_custom_call.1} parent=5 // pred_check_branch
        %248 = sbr.rel (%p245) target = $region36
      $region35: #{tpu_custom_call.1} parent=5 // pred_region
        %s249 = ssub.s32 %s23, 1
        %s250 = sand.u32 %s36, 1
        %s251 = scalar_lea.sflag [#allocation3], %s250
        %s252 = sand.u32 %s36, 1
        %s253 = smul.addr %s252, 32
        %s254 = scalar_lea.vmem [#allocation2], %s253
        // Predicated region
        $region37: #{tpu_custom_call.1} parent=35 // pred_check
          %p255 = pneg %p49
        $region38: #{tpu_custom_call.1} parent=35 // pred_check_branch
          %257 = sbr.rel (%p255) target = $region40
        $region39: #{tpu_custom_call.1} parent=35 // pred_region
          %259 = dma.done %s251, 512
        $region40: #{tpu_custom_call.1} parent=35 // pred_fallthru
          _
        // Predicated region
        $region41: #{tpu_custom_call.1} parent=35 // pred_check
          %p260 = pneg %p70
        $region42: #{tpu_custom_call.1} parent=35 // pred_check_branch
          %262 = sbr.rel (%p260) target = $region44
        $region43: #{tpu_custom_call.1} parent=35 // pred_region
          %264 = dma.done [#allocation6], 128
        $region44: #{tpu_custom_call.1} parent=35 // pred_fallthru
          _
        // Predicated region
        $region45: #{tpu_custom_call.1} parent=35 // pred_check
          %p265 = pneg %p91
        $region46: #{tpu_custom_call.1} parent=35 // pred_check_branch
          %267 = sbr.rel (%p265) target = $region48
        $region47: #{tpu_custom_call.1} parent=35 // pred_region
          %269 = dma.done [#allocation6], 1024
        $region48: #{tpu_custom_call.1} parent=35 // pred_fallthru
          _
        // Predicated region
        $region49: #{tpu_custom_call.1} parent=35 // pred_check
          %p270 = pneg %p112
        $region50: #{tpu_custom_call.1} parent=35 // pred_check_branch
          %272 = sbr.rel (%p270) target = $region52
        $region51: #{tpu_custom_call.1} parent=35 // pred_region
          %274 = dma.done [#allocation9], 1024
        $region52: #{tpu_custom_call.1} parent=35 // pred_fallthru
          _
        %s275 = sand.u32 %s36, 1
        %s276 = scalar_lea.sflag [#allocation3], %s275
        %s277 = sand.u32 %s36, 1
        %s278 = smul.addr %s277, 32
        %s279 = scalar_lea.vmem [#allocation2], %s278
        %p280 = pneg %p49
        %p281 = pneg %p46
        %p282 = pneg %p70
        %p283 = pneg %p67
        %p284 = pneg %p91
        %p285 = pneg %p88
        %p286 = pneg %p112
        %p287 = pneg %p109
        %p288 = pneg %p138
        %p289 = pneg %p135
        %s290 = sand.u32 %s125, 1
        %s291 = scalar_lea.sflag [#allocation4], %s290
        %s292 = sand.u32 %s125, 1
        %s293 = smul.addr %s292, 32
        %s294 = scalar_lea.vmem [#allocation10], %s293
        %p295 = pneg %p164
        %p296 = pneg %p161
        %s297 = sand.u32 %s151, 1
        %s298 = scalar_lea.sflag [#allocation12], %s297
        %s299 = sand.u32 %s151, 1
        %s300 = smul.addr %s299, 32
        %s301 = scalar_lea.vmem [#allocation11], %s300
        %v302 = vld [vmem:[%s254] sm:$0xff]
        %v303 = vld [vmem:[%s254 + $0x8] sm:$0xff]
        %v304 = vld [vmem:[%s254 + $0x10] sm:$0xff]
        %v305 = vld [vmem:[%s254 + $0x18] sm:$0xff]
        %v306 = vld [vmem:[#allocation7] ss:$8 sm:$0xf]
        %s307 = scalar_lea.vmem [#allocation7], 1
        %v308 = vld [vmem:[%s307] ss:$8 sm:$0xf]
        %s309 = scalar_lea.vmem [#allocation7], 2
        %v310 = vld [vmem:[%s309] ss:$8 sm:$0xf]
        %s311 = scalar_lea.vmem [#allocation7], 3
        %v312 = vld [vmem:[%s311] ss:$8 sm:$0xf]
        %s313 = scalar_lea.vmem [#allocation7], 4
        %v314 = vld [vmem:[%s313] ss:$8 sm:$0xf]
        %s315 = scalar_lea.vmem [#allocation7], 5
        %v316 = vld [vmem:[%s315] ss:$8 sm:$0xf]
        %s317 = scalar_lea.vmem [#allocation7], 6
        %v318 = vld [vmem:[%s317] ss:$8 sm:$0xf]
        %s319 = scalar_lea.vmem [#allocation7], 7
        %v320 = vld [vmem:[%s319] ss:$8 sm:$0xf]
        %s321 = scalar_lea.vmem [#allocation7], 32
        %v322 = vld [vmem:[%s321] ss:$8 sm:$0xf]
        %s323 = scalar_lea.vmem [#allocation7], 33
        %v324 = vld [vmem:[%s323] ss:$8 sm:$0xf]
        %v325 = vld [vmem:[#allocation8] ss:$8 sm:$0xf]
        %s326 = scalar_lea.vmem [#allocation8], 1
        %v327 = vld [vmem:[%s326] ss:$8 sm:$0xf]
        %s328 = scalar_lea.vmem [#allocation8], 2
        %v329 = vld [vmem:[%s328] ss:$8 sm:$0xf]
        %s330 = scalar_lea.vmem [#allocation8], 3
        %v331 = vld [vmem:[%s330] ss:$8 sm:$0xf]
        %s332 = scalar_lea.vmem [#allocation8], 4
        %v333 = vld [vmem:[%s332] ss:$8 sm:$0xf]
        %s334 = scalar_lea.vmem [#allocation8], 5
        %v335 = vld [vmem:[%s334] ss:$8 sm:$0xf]
        %s336 = scalar_lea.vmem [#allocation8], 6
        %v337 = vld [vmem:[%s336] ss:$8 sm:$0xf]
        %s338 = scalar_lea.vmem [#allocation8], 7
        %v339 = vld [vmem:[%s338] ss:$8 sm:$0xf]
        %s340 = scalar_lea.vmem [#allocation8], 32
        %v341 = vld [vmem:[%s340] ss:$8 sm:$0xf]
        %v342 = vld [vmem:[#allocation5] ss:$2 sm:$0xf]
        %v344 = vperm.slane %v342, 0
        %v345 = vperm.slane %v342, 1
        %v346 = vperm.slane %v342, 2
        %v347 = vperm.slane %v342, 3
        %v352 = vsub.f32 %v302, %v344
        %v353 = vsub.f32 %v303, %v345
        %v354 = vsub.f32 %v304, %v346
        %v355 = vsub.f32 %v305, %v347
        %v357 = vperm.slane %v324, 0
        %v358 = vperm.slane %v324, 1
        %v359 = vperm.slane %v324, 2
        %v360 = vperm.slane %v324, 3
        %v365 = vmul.f32 %v357, %v352
        %v366 = vmul.f32 %v358, %v353
        %v367 = vmul.f32 %v359, %v354
        %v368 = vmul.f32 %v360, %v355
        %v370 = vperm.slane %v322, 0
        %v371 = vperm.slane %v322, 1
        %v372 = vperm.slane %v322, 2
        %v373 = vperm.slane %v322, 3
        %v378 = vadd.f32 %v365, %v370
        %v379 = vadd.f32 %v366, %v371
        %v380 = vadd.f32 %v367, %v372
        %v381 = vadd.f32 %v368, %v373
        %v382 = vmul.f32 %v378, %v352
        %v383 = vmul.f32 %v379, %v353
        %v384 = vmul.f32 %v380, %v354
        %v385 = vmul.f32 %v381, %v355
        %v387 = vperm.slane %v320, 0
        %v388 = vperm.slane %v320, 1
        %v389 = vperm.slane %v320, 2
        %v390 = vperm.slane %v320, 3
        %v395 = vadd.f32 %v382, %v387
        %v396 = vadd.f32 %v383, %v388
        %v397 = vadd.f32 %v384, %v389
        %v398 = vadd.f32 %v385, %v390
        %v399 = vmul.f32 %v395, %v352
        %v400 = vmul.f32 %v396, %v353
        %v401 = vmul.f32 %v397, %v354
        %v402 = vmul.f32 %v398, %v355
        %v404 = vperm.slane %v318, 0
        %v405 = vperm.slane %v318, 1
        %v406 = vperm.slane %v318, 2
        %v407 = vperm.slane %v318, 3
        %v412 = vadd.f32 %v399, %v404
        %v413 = vadd.f32 %v400, %v405
        %v414 = vadd.f32 %v401, %v406
        %v415 = vadd.f32 %v402, %v407
        %v416 = vmul.f32 %v412, %v352
        %v417 = vmul.f32 %v413, %v353
        %v418 = vmul.f32 %v414, %v354
        %v419 = vmul.f32 %v415, %v355
        %v421 = vperm.slane %v316, 0
        %v422 = vperm.slane %v316, 1
        %v423 = vperm.slane %v316, 2
        %v424 = vperm.slane %v316, 3
        %v429 = vadd.f32 %v416, %v421
        %v430 = vadd.f32 %v417, %v422
        %v431 = vadd.f32 %v418, %v423
        %v432 = vadd.f32 %v419, %v424
        %v433 = vmul.f32 %v429, %v352
        %v434 = vmul.f32 %v430, %v353
        %v435 = vmul.f32 %v431, %v354
        %v436 = vmul.f32 %v432, %v355
        %v438 = vperm.slane %v314, 0
        %v439 = vperm.slane %v314, 1
        %v440 = vperm.slane %v314, 2
        %v441 = vperm.slane %v314, 3
        %v446 = vadd.f32 %v433, %v438
        %v447 = vadd.f32 %v434, %v439
        %v448 = vadd.f32 %v435, %v440
        %v449 = vadd.f32 %v436, %v441
        %v450 = vmul.f32 %v446, %v352
        %v451 = vmul.f32 %v447, %v353
        %v452 = vmul.f32 %v448, %v354
        %v453 = vmul.f32 %v449, %v355
        %v455 = vperm.slane %v312, 0
        %v456 = vperm.slane %v312, 1
        %v457 = vperm.slane %v312, 2
        %v458 = vperm.slane %v312, 3
        %v463 = vadd.f32 %v450, %v455
        %v464 = vadd.f32 %v451, %v456
        %v465 = vadd.f32 %v452, %v457
        %v466 = vadd.f32 %v453, %v458
        %v467 = vmul.f32 %v463, %v352
        %v468 = vmul.f32 %v464, %v353
        %v469 = vmul.f32 %v465, %v354
        %v470 = vmul.f32 %v466, %v355
        %v472 = vperm.slane %v310, 0
        %v473 = vperm.slane %v310, 1
        %v474 = vperm.slane %v310, 2
        %v475 = vperm.slane %v310, 3
        %v480 = vadd.f32 %v467, %v472
        %v481 = vadd.f32 %v468, %v473
        %v482 = vadd.f32 %v469, %v474
        %v483 = vadd.f32 %v470, %v475
        %v484 = vmul.f32 %v480, %v352
        %v485 = vmul.f32 %v481, %v353
        %v486 = vmul.f32 %v482, %v354
        %v487 = vmul.f32 %v483, %v355
        %v489 = vperm.slane %v308, 0
        %v490 = vperm.slane %v308, 1
        %v491 = vperm.slane %v308, 2
        %v492 = vperm.slane %v308, 3
        %v497 = vadd.f32 %v484, %v489
        %v498 = vadd.f32 %v485, %v490
        %v499 = vadd.f32 %v486, %v491
        %v500 = vadd.f32 %v487, %v492
        %v501 = vmul.f32 %v497, %v352
        %v502 = vmul.f32 %v498, %v353
        %v503 = vmul.f32 %v499, %v354
        %v504 = vmul.f32 %v500, %v355
        %v506 = vperm.slane %v306, 0
        %v507 = vperm.slane %v306, 1
        %v508 = vperm.slane %v306, 2
        %v509 = vperm.slane %v306, 3
        %v514 = vadd.f32 %v501, %v506
        %v515 = vadd.f32 %v502, %v507
        %v516 = vadd.f32 %v503, %v508
        %v517 = vadd.f32 %v504, %v509
        %v519 = vperm.slane %v341, 0
        %v520 = vperm.slane %v341, 1
        %v521 = vperm.slane %v341, 2
        %v522 = vperm.slane %v341, 3
        %v527 = vmul.f32 %v519, %v352
        %v528 = vmul.f32 %v520, %v353
        %v529 = vmul.f32 %v521, %v354
        %v530 = vmul.f32 %v522, %v355
        %v532 = vperm.slane %v339, 0
        %v533 = vperm.slane %v339, 1
        %v534 = vperm.slane %v339, 2
        %v535 = vperm.slane %v339, 3
        %v540 = vadd.f32 %v527, %v532
        %v541 = vadd.f32 %v528, %v533
        %v542 = vadd.f32 %v529, %v534
        %v543 = vadd.f32 %v530, %v535
        %v544 = vmul.f32 %v540, %v352
        %v545 = vmul.f32 %v541, %v353
        %v546 = vmul.f32 %v542, %v354
        %v547 = vmul.f32 %v543, %v355
        %v549 = vperm.slane %v337, 0
        %v550 = vperm.slane %v337, 1
        %v551 = vperm.slane %v337, 2
        %v552 = vperm.slane %v337, 3
        %v557 = vadd.f32 %v544, %v549
        %v558 = vadd.f32 %v545, %v550
        %v559 = vadd.f32 %v546, %v551
        %v560 = vadd.f32 %v547, %v552
        %v561 = vmul.f32 %v557, %v352
        %v562 = vmul.f32 %v558, %v353
        %v563 = vmul.f32 %v559, %v354
        %v564 = vmul.f32 %v560, %v355
        %v566 = vperm.slane %v335, 0
        %v567 = vperm.slane %v335, 1
        %v568 = vperm.slane %v335, 2
        %v569 = vperm.slane %v335, 3
        %v574 = vadd.f32 %v561, %v566
        %v575 = vadd.f32 %v562, %v567
        %v576 = vadd.f32 %v563, %v568
        %v577 = vadd.f32 %v564, %v569
        %v578 = vmul.f32 %v574, %v352
        %v579 = vmul.f32 %v575, %v353
        %v580 = vmul.f32 %v576, %v354
        %v581 = vmul.f32 %v577, %v355
        %v583 = vperm.slane %v333, 0
        %v584 = vperm.slane %v333, 1
        %v585 = vperm.slane %v333, 2
        %v586 = vperm.slane %v333, 3
        %v591 = vadd.f32 %v578, %v583
        %v592 = vadd.f32 %v579, %v584
        %v593 = vadd.f32 %v580, %v585
        %v594 = vadd.f32 %v581, %v586
        %v595 = vmul.f32 %v591, %v352
        %v596 = vmul.f32 %v592, %v353
        %v597 = vmul.f32 %v593, %v354
        %v598 = vmul.f32 %v594, %v355
        %v600 = vperm.slane %v331, 0
        %v601 = vperm.slane %v331, 1
        %v602 = vperm.slane %v331, 2
        %v603 = vperm.slane %v331, 3
        %v608 = vadd.f32 %v595, %v600
        %v609 = vadd.f32 %v596, %v601
        %v610 = vadd.f32 %v597, %v602
        %v611 = vadd.f32 %v598, %v603
        %v612 = vmul.f32 %v608, %v352
        %v613 = vmul.f32 %v609, %v353
        %v614 = vmul.f32 %v610, %v354
        %v615 = vmul.f32 %v611, %v355
        %v617 = vperm.slane %v329, 0
        %v618 = vperm.slane %v329, 1
        %v619 = vperm.slane %v329, 2
        %v620 = vperm.slane %v329, 3
        %v625 = vadd.f32 %v612, %v617
        %v626 = vadd.f32 %v613, %v618
        %v627 = vadd.f32 %v614, %v619
        %v628 = vadd.f32 %v615, %v620
        %v629 = vmul.f32 %v625, %v352
        %v630 = vmul.f32 %v626, %v353
        %v631 = vmul.f32 %v627, %v354
        %v632 = vmul.f32 %v628, %v355
        %v634 = vperm.slane %v327, 0
        %v635 = vperm.slane %v327, 1
        %v636 = vperm.slane %v327, 2
        %v637 = vperm.slane %v327, 3
        %v642 = vadd.f32 %v629, %v634
        %v643 = vadd.f32 %v630, %v635
        %v644 = vadd.f32 %v631, %v636
        %v645 = vadd.f32 %v632, %v637
        %v646 = vmul.f32 %v642, %v352
        %v647 = vmul.f32 %v643, %v353
        %v648 = vmul.f32 %v644, %v354
        %v649 = vmul.f32 %v645, %v355
        %v651 = vperm.slane %v325, 0
        %v652 = vperm.slane %v325, 1
        %v653 = vperm.slane %v325, 2
        %v654 = vperm.slane %v325, 3
        %v659 = vadd.f32 %v646, %v651
        %v660 = vadd.f32 %v647, %v652
        %v661 = vadd.f32 %v648, %v653
        %v662 = vadd.f32 %v649, %v654
        %663 = vst [vmem:[%s294] sm:$0xff] %v514
        %664 = vst [vmem:[%s294 + $0x8] sm:$0xff] %v515
        %665 = vst [vmem:[%s294 + $0x10] sm:$0xff] %v516
        %666 = vst [vmem:[%s294 + $0x18] sm:$0xff] %v517
        %v667 = vlog2.pop %v659
        %v668 = vmul.f32 %v667, 0.6931472
        %v669 = vlog2.pop %v660
        %v670 = vmul.f32 %v669, 0.6931472
        %v671 = vlog2.pop %v661
        %v672 = vmul.f32 %v671, 0.6931472
        %v673 = vlog2.pop %v662
        %v674 = vmul.f32 %v673, 0.6931472
        %675 = vst [vmem:[%s301] sm:$0xff] %v668
        %676 = vst [vmem:[%s301 + $0x8] sm:$0xff] %v670
        %677 = vst [vmem:[%s301 + $0x10] sm:$0xff] %v672
        %678 = vst [vmem:[%s301 + $0x18] sm:$0xff] %v674
        %s679 = sand.u32 %s125, 1
        %s680 = scalar_lea.sflag [#allocation4], %s679
        %s681 = sand.u32 %s125, 1
        %s682 = smul.addr %s681, 32
        %s683 = scalar_lea.vmem [#allocation10], %s682
        %s684 = sand.u32 %s151, 1
        %s685 = scalar_lea.sflag [#allocation12], %s684
        %s686 = sand.u32 %s151, 1
        %s687 = smul.addr %s686, 32
        %s688 = scalar_lea.vmem [#allocation11], %s687
        // Predicated region
        $region53: #{tpu_custom_call.1} parent=35 // pred_check
          %p689 = pneg %p135
        $region54: #{tpu_custom_call.1} parent=35 // pred_check_branch
          %691 = sbr.rel (%p689) target = $region56
        $region55: #{tpu_custom_call.1} parent=35 // pred_region
          %693 = vsyncadd %s680, 0
          %s694 = smul.addr %s28, 4
          %s695 = smul.addr %s694, 8
          %s696 = scalar_lea.hbm %s4, %s695
          %s698 = sshll.u32 %s683, 4
          %s699 = int_to_ptr.vmem [resolvable:$true] %s698
          %s700 = sshll.u32 %s696, 4
          %s701 = int_to_ptr.hbm [resolvable:$true] %s700
          %703 = dma.vmem_to_hbm [thread:$0]  %s699, 512, %s701, %s680
        $region56: #{tpu_custom_call.1} parent=35 // pred_fallthru
          _
        // Predicated region
        $region57: #{tpu_custom_call.1} parent=35 // pred_check
          %p704 = pneg %p161
        $region58: #{tpu_custom_call.1} parent=35 // pred_check_branch
          %706 = sbr.rel (%p704) target = $region60
        $region59: #{tpu_custom_call.1} parent=35 // pred_region
          %708 = vsyncadd %s685, 0
          %s709 = smul.addr %s28, 4
          %s710 = smul.addr %s709, 8
          %s711 = scalar_lea.hbm %s5, %s710
          %s713 = sshll.u32 %s688, 4
          %s714 = int_to_ptr.vmem [resolvable:$true] %s713
          %s715 = sshll.u32 %s711, 4
          %s716 = int_to_ptr.hbm [resolvable:$true] %s715
          %718 = dma.vmem_to_hbm [thread:$0]  %s714, 512, %s716, %s685
        $region60: #{tpu_custom_call.1} parent=35 // pred_fallthru
          _
      $region36: #{tpu_custom_call.1} parent=5 // pred_fallthru
        _
      %p719 = scmp.le.s32.totalorder 2, %s23
      // Predicated region
      $region61: #{tpu_custom_call.1} parent=5 // pred_check
        %p720 = pneg %p719
      $region62: #{tpu_custom_call.1} parent=5 // pred_check_branch
        %722 = sbr.rel (%p720) target = $region64
      $region63: #{tpu_custom_call.1} parent=5 // pred_region
        %s723 = ssub.s32 %s23, 2
        // Predicated region
        $region65: #{tpu_custom_call.1} parent=63 // pred_check
          %p724 = pneg %p141
        $region66: #{tpu_custom_call.1} parent=63 // pred_check_branch
          %726 = sbr.rel (%p724) target = $region68
        $region67: #{tpu_custom_call.1} parent=63 // pred_region
          %s727 = sand.u32 %s126, 1
          %s728 = scalar_lea.sflag [#allocation4], %s727
          %s729 = sand.u32 %s126, 1
          %s730 = smul.addr %s729, 32
          %s731 = scalar_lea.vmem [#allocation10], %s730
          %733 = dma.done %s728, 512
        $region68: #{tpu_custom_call.1} parent=63 // pred_fallthru
          _
        // Predicated region
        $region69: #{tpu_custom_call.1} parent=63 // pred_check
          %p734 = pneg %p167
        $region70: #{tpu_custom_call.1} parent=63 // pred_check_branch
          %736 = sbr.rel (%p734) target = $region72
        $region71: #{tpu_custom_call.1} parent=63 // pred_region
          %s737 = sand.u32 %s152, 1
          %s738 = scalar_lea.sflag [#allocation12], %s737
          %s739 = sand.u32 %s152, 1
          %s740 = smul.addr %s739, 32
          %s741 = scalar_lea.vmem [#allocation11], %s740
          %743 = dma.done %s738, 512
        $region72: #{tpu_custom_call.1} parent=63 // pred_fallthru
          _
      $region64: #{tpu_custom_call.1} parent=5 // pred_fallthru
        _
    $region6: #{tpu_custom_call.1} parent=1 // loop_footer
      %s27 = sadd.s32 1, %s23
    $region7: #{tpu_custom_call.1} parent=1 // loop_footer_branch
      %22 = sbr.rel target = $region3
    $region8: #{tpu_custom_call.1} parent=1 // loop_exit
      _
    %744 = vsyncpa [#allocation3], 1
    %s745 = scalar_lea.sflag [#allocation3], 1
    %746 = vsyncpa %s745, 1
    %747 = vsyncpa [#allocation6], 1
    %748 = vsyncpa [#allocation9], 1
    %749 = vsyncpa [#allocation4], 1
    %s750 = scalar_lea.sflag [#allocation4], 1
    %751 = vsyncpa %s750, 1
    %752 = vsyncpa [#allocation12], 1
    %s753 = scalar_lea.sflag [#allocation12], 1
    %754 = vsyncpa %s753, 1

</llo_original>
